<compile_context>
chip_gen: v7x
topology: tpu7x:2x2x1
jax: 0.10.0
libtpu: 0.0.40
codegen_flags: <defaults>
</compile_context>

<pallas_src>
import jax
import jax.numpy as jnp
from jax.experimental import pallas as pl
from jax.experimental.pallas import tpu as pltpu

HIDDEN = 16
OUT = 2
LEAKY_SLOPE = 0.01  # F.leaky_relu default negative_slope


def gcn_kernel(adj_ref, x_ref, w1_ref, b1_ref, w2_ref, b2_ref, out_ref):
    """Processes a (TB, N, ...) batch tile per grid step."""
    tb, n, _ = adj_ref.shape
    f_in = x_ref.shape[-1]

    adj = adj_ref[...]            # (TB, N, N)     stream dtype (bf16/f32)
    x = x_ref[...]                # (TB, N, F_in)  stream dtype
    w1 = w1_ref[...]              # (F_in, HIDDEN) stream dtype
    b1 = b1_ref[...]              # (1, HIDDEN)    f32
    w2 = w2_ref[...]              # (HIDDEN, OUT)  f32
    b2 = b2_ref[...]              # (1, OUT)       f32

    # ---- layer 1: h = leaky_relu(adj @ (x @ W1) + b1) ----------------------
    if n % 8 == 0:
        # Fuse the batch into the M dimension (sublane-aligned -> reshape is
        # layout-free): one MXU call instead of TB tiny ones.
        support1 = jnp.dot(x.reshape(tb * n, f_in), w1,
                           preferred_element_type=jnp.float32)
        support1 = support1.reshape(tb, n, HIDDEN)
    else:
        # N not sublane-aligned: keep the dot batched, avoid a relayout copy.
        support1 = jnp.einsum('bnf,fh->bnh', x, w1,
                              preferred_element_type=jnp.float32)

    h = jnp.einsum('bnm,bmh->bnh', adj, support1.astype(adj.dtype),
                   preferred_element_type=jnp.float32)
    h = h + b1.reshape(1, 1, HIDDEN)                  # f32 bias add
    h = jnp.where(h > 0, h, LEAKY_SLOPE * h)          # f32 leaky_relu

    # ---- layer 2 + node-mean, folded ---------------------------------------
    # mean_n(adj @ (h @ W2) + b2) == ((colmean(adj) @ h) @ W2) + b2
    # Column-sum of adj via a ones-row matmul (MXU is idle; avoids an XLU
    # sublane reduce over the whole adjacency tile).
    ones = jnp.full((tb, 1, n), 1.0, dtype=adj.dtype)
    colsum = jnp.einsum('brn,bnm->brm', ones, adj,
                        preferred_element_type=jnp.float32)       # (TB, 1, N)
    pooled = jnp.einsum('brm,bmh->brh', colsum, h,
                        preferred_element_type=jnp.float32)       # (TB, 1, H)
    pooled = pooled.reshape(tb, HIDDEN) * jnp.float32(1.0 / n)    # exact /N in f32

    logits = jnp.dot(pooled, w2, preferred_element_type=jnp.float32) + b2
    out_ref[...] = logits[None].astype(out_ref.dtype)             # (1, TB, OUT)


def _vmem_budget_bytes():
    """Generation-aware VMEM budget + vmem_limit_bytes (v5e/v6e 128 MiB, v7x 64 MiB)."""
    try:
        info = pltpu.get_tpu_info()
        cap = int(getattr(info, "vmem_capacity_bytes", 0)) or (64 << 20)
    except Exception:
        cap = 64 << 20                       # conservative fallback (v7x per-core)
    limit = min(int(cap * 0.70), 96 << 20)   # ~90 MiB on v5e/v6e, ~45 MiB on v7x
    budget = int(limit * 0.85)               # footprint budget for tiles + intermediates
    return budget, limit


def _pick_batch_block(B, N, F_in, stream_bytes, budget):
    """Largest batch tile whose full footprint (inputs + intermediates) fits the budget."""
    per_b = (2 * N * N * stream_bytes          # double-buffered adjacency tile
             + 2 * N * F_in * stream_bytes     # double-buffered feature tile
             + 2 * N * HIDDEN * 4              # support1 + h (f32 intermediates)
             + N * HIDDEN * stream_bytes       # support1 recast for the propagation matmul
             + 2 * N * 4                       # column-sum + slack
             + 2 * OUT * 4)                    # double-buffered output tile
    fixed = (4 * (F_in * HIDDEN + 2 * HIDDEN + HIDDEN * OUT + 2 * OUT)   # resident weights
             + (2 << 20))                      # Mosaic internal-scratch headroom
    avail = budget - fixed
    if avail < per_b:
        # TODO(synk): add a node-row (adjacency row-block) grid axis so very large N
        # still fits VMEM; the column-mean of the fold then needs a cheap pre-pass
        # (or the symmetric-adjacency identity) to stay single-pass.
        raise ValueError(
            f"A single (1, {N}, {N}) batch slab plus intermediates ({per_b + fixed} B) "
            f"exceeds the VMEM budget ({budget} B); node-row tiling is required.")
    tb = int(min(B, avail // per_b))
    if B >= 2:
        tb = min(tb, B // 2)   # keep >= 2 grid steps so both v7x TensorCores get work
    tb = max(tb, 1)
    while B % tb != 0:         # keep every block full (3-D output block removes any
        tb -= 1                # 8-divisibility requirement on the batch tile)
    return tb


def gcn_net(adjacency, feature, w1, b1, w2, b2, *,
            stream_dtype=jnp.bfloat16, batch_block=None):
    B, N, _ = adjacency.shape
    F_in = feature.shape[-1]
    sbytes = jnp.dtype(stream_dtype).itemsize

    budget, vmem_limit = _vmem_budget_bytes()
    if batch_block is None:
        batch_block = _pick_batch_block(B, N, F_in, sbytes, budget)
    assert B % batch_block == 0
    grid = (B // batch_block,)

    # Stream the bandwidth-dominant operands (adj, feature, W1) in stream_dtype;
    # biases / W2 and all accumulation stay f32.
    adj_s = adjacency if adjacency.dtype == stream_dtype else adjacency.astype(stream_dtype)
    x_s = feature if feature.dtype == stream_dtype else feature.astype(stream_dtype)
    w1_s = w1 if w1.dtype == stream_dtype else w1.astype(stream_dtype)
    b1_f = b1.astype(jnp.float32).reshape(1, HIDDEN)
    w2_f = w2.astype(jnp.float32)
    b2_f = b2.astype(jnp.float32).reshape(1, OUT)

    flops = 2 * B * (N * F_in * HIDDEN + N * N * HIDDEN + N * N
                     + N * HIDDEN + HIDDEN * OUT)
    bytes_accessed = (sbytes * (B * N * N + B * N * F_in + F_in * HIDDEN)
                      + 4 * (HIDDEN + HIDDEN * OUT + OUT + B * OUT))

    out3 = pl.pallas_call(
        gcn_kernel,
        out_shape=jax.ShapeDtypeStruct((grid[0], batch_block, OUT), jnp.float32),
        grid=grid,
        in_specs=[
            pl.BlockSpec((batch_block, N, N), lambda b: (b, 0, 0)),      # adjacency
            pl.BlockSpec((batch_block, N, F_in), lambda b: (b, 0, 0)),   # feature
            pl.BlockSpec((F_in, HIDDEN), lambda b: (0, 0)),              # W1 (resident)
            pl.BlockSpec((1, HIDDEN), lambda b: (0, 0)),                 # b1 (resident)
            pl.BlockSpec((HIDDEN, OUT), lambda b: (0, 0)),               # W2 (resident)
            pl.BlockSpec((1, OUT), lambda b: (0, 0)),                    # b2 (resident)
        ],
        out_specs=pl.BlockSpec((1, batch_block, OUT), lambda b: (b, 0, 0)),
        compiler_params=pltpu.CompilerParams(
            dimension_semantics=("parallel",),
            vmem_limit_bytes=vmem_limit),
        cost_estimate=pl.CostEstimate(
            flops=flops, transcendentals=0, bytes_accessed=bytes_accessed),
    )(adj_s, x_s, w1_s, b1_f, w2_f, b2_f)

    return out3.reshape(B, OUT)


def init_params(key, n_input):
    """Deterministic kaiming-uniform-like init for weights, zeros for biases."""
    k1, k2 = jax.random.split(key)
    bound1 = jnp.sqrt(6.0 / n_input)   # kaiming_uniform fan_in = input_dim
    bound2 = jnp.sqrt(6.0 / HIDDEN)
    w1 = jax.random.uniform(k1, (n_input, HIDDEN), jnp.float32,
                            minval=-bound1, maxval=bound1)
    b1 = jnp.zeros((1, HIDDEN), jnp.float32)
    w2 = jax.random.uniform(k2, (HIDDEN, OUT), jnp.float32,
                            minval=-bound2, maxval=bound2)
    b2 = jnp.zeros((1, OUT), jnp.float32)
    return w1, b1, w2, b2


def gcn_net_ref(adjacency, feature, w1, b1, w2, b2):
    """Pure-JAX reference matching the PyTorch forward (no algebraic folds)."""
    support1 = jnp.einsum('bnf,fh->bnh', feature, w1)
    h = jnp.einsum('bnm,bmh->bnh', adjacency, support1) + b1[None]
    h = jnp.where(h > 0, h, LEAKY_SLOPE * h)
    support2 = jnp.einsum('bnh,ho->bno', h, w2)
    logits = jnp.einsum('bnm,bmo->bno', adjacency, support2) + b2[None]
    return logits.mean(axis=1)


if __name__ == "__main__":
    B, N, n_input = 2, 16, 8
    key = jax.random.PRNGKey(0)
    k_adj, k_feat, k_param = jax.random.split(key, 3)

    adjacency = jax.random.uniform(k_adj, (B, N, N), jnp.float32)
    feature = jax.random.normal(k_feat, (B, N, n_input), jnp.float32)
    w1, b1, w2, b2 = init_params(k_param, n_input)

    ref = gcn_net_ref(adjacency, feature, w1, b1, w2, b2)

    # f32 streaming path: numerically comparable with the pure-JAX reference.
    out_f32 = jax.block_until_ready(
        gcn_net(adjacency, feature, w1, b1, w2, b2, stream_dtype=jnp.float32))
    assert out_f32.shape == (B, OUT)
    assert jnp.allclose(out_f32, ref, atol=1e-4, rtol=1e-4)

    # Default bf16-streaming path (HBM-bandwidth optimized), looser tolerance.
    out_bf16 = jax.block_until_ready(gcn_net(adjacency, feature, w1, b1, w2, b2))
    assert out_bf16.shape == (B, OUT)
    assert jnp.allclose(out_bf16, ref, atol=1e-1, rtol=5e-2)

    print("KERNEL_OK")
</pallas_src>

<mosaic_0001>
module attributes {stable_mosaic.version = 11 : i64} {
  func.func @gcn_kernel(%arg0: i32, %arg1: memref<1x16x16xf32, #tpu.memory_space<vmem>>, %arg2: memref<1x16x8xf32, #tpu.memory_space<vmem>>, %arg3: memref<8x16xf32, #tpu.memory_space<vmem>>, %arg4: memref<1x16xf32, #tpu.memory_space<vmem>>, %arg5: memref<16x2xf32, #tpu.memory_space<vmem>>, %arg6: memref<1x2xf32, #tpu.memory_space<vmem>>, %arg7: memref<1x1x2xf32, #tpu.memory_space<vmem>>) attributes {dimension_semantics = [#tpu.dimension_semantics<parallel>], iteration_bounds = array<i64: 2>, scalar_prefetch = 0 : i64, scratch_operands = 0 : i64, tpu.core_type = #tpu.core_type<tc>, window_params = [{transform_indices = @transform_0, window_bounds = array<i64: 1, 16, 16>}, {transform_indices = @transform_1, window_bounds = array<i64: 1, 16, 8>}, {pipeline_mode = #tpu.pipeline_mode<synchronous>, transform_indices = @transform_2, window_bounds = array<i64: 8, 16>}, {pipeline_mode = #tpu.pipeline_mode<synchronous>, transform_indices = @transform_3, window_bounds = array<i64: 1, 16>}, {pipeline_mode = #tpu.pipeline_mode<synchronous>, transform_indices = @transform_4, window_bounds = array<i64: 16, 2>}, {pipeline_mode = #tpu.pipeline_mode<synchronous>, transform_indices = @transform_5, window_bounds = array<i64: 1, 2>}, {transform_indices = @transform_6, window_bounds = array<i64: 1, 1, 2>}]} {
    %c0 = arith.constant 0 : index
    %c0_0 = arith.constant 0 : index
    %c0_1 = arith.constant 0 : index
    %0 = vector.load %arg1[%c0, %c0_0, %c0_1] : memref<1x16x16xf32, #tpu.memory_space<vmem>>, vector<1x16x16xf32>
    %c0_2 = arith.constant 0 : index
    %c0_3 = arith.constant 0 : index
    %c0_4 = arith.constant 0 : index
    %1 = vector.load %arg2[%c0_2, %c0_3, %c0_4] : memref<1x16x8xf32, #tpu.memory_space<vmem>>, vector<1x16x8xf32>
    %c0_5 = arith.constant 0 : index
    %c0_6 = arith.constant 0 : index
    %2 = vector.load %arg3[%c0_5, %c0_6] : memref<8x16xf32, #tpu.memory_space<vmem>>, vector<8x16xf32>
    %c0_7 = arith.constant 0 : index
    %c0_8 = arith.constant 0 : index
    %3 = vector.load %arg4[%c0_7, %c0_8] : memref<1x16xf32, #tpu.memory_space<vmem>>, vector<1x16xf32>
    %c0_9 = arith.constant 0 : index
    %c0_10 = arith.constant 0 : index
    %4 = vector.load %arg5[%c0_9, %c0_10] : memref<16x2xf32, #tpu.memory_space<vmem>>, vector<16x2xf32>
    %c0_11 = arith.constant 0 : index
    %c0_12 = arith.constant 0 : index
    %5 = vector.load %arg6[%c0_11, %c0_12] : memref<1x2xf32, #tpu.memory_space<vmem>>, vector<1x2xf32>
    %6 = vector.shape_cast %1 : vector<1x16x8xf32> to vector<16x8xf32>
    %cst = arith.constant dense<0.000000e+00> : vector<16x16xf32>
    %7 = tpu.matmul %6, %2, %cst {dimension_numbers = #tpu.dot_dimension_numbers<[1], [0], [0], [1], [0, 0, 1, 1], [], []>} : vector<16x8xf32>, vector<8x16xf32>, vector<16x16xf32> -> vector<16x16xf32>
    %8 = vector.shape_cast %7 : vector<16x16xf32> to vector<1x16x16xf32>
    "tpu.trace_start"() <{level = 10 : i32, message = "bnm,bmh->bnh"}> : () -> ()
    %cst_13 = arith.constant dense<0.000000e+00> : vector<1x16x16xf32>
    %9 = tpu.matmul %0, %8, %cst_13 {dimension_numbers = #tpu.dot_dimension_numbers<[2], [1], [1], [2], [0, 0, 0, 1, 1, 2], [0], [0]>} : vector<1x16x16xf32>, vector<1x16x16xf32>, vector<1x16x16xf32> -> vector<1x16x16xf32>
    "tpu.trace_stop"() : () -> ()
    %10 = vector.shape_cast %3 : vector<1x16xf32> to vector<1x1x16xf32>
    %11 = vector.broadcast %10 : vector<1x1x16xf32> to vector<1x16x16xf32>
    %12 = arith.addf %9, %11 : vector<1x16x16xf32>
    %cst_14 = arith.constant 0.000000e+00 : f32
    %13 = vector.broadcast %cst_14 : f32 to vector<1x16x16xf32>
    %14 = arith.cmpf ogt, %12, %13 : vector<1x16x16xf32>
    %cst_15 = arith.constant 0.00999999977 : f32
    %15 = vector.broadcast %cst_15 : f32 to vector<1x16x16xf32>
    %16 = arith.mulf %15, %12 : vector<1x16x16xf32>
    %17 = arith.select %14, %12, %16 : vector<1x16x16xi1>, vector<1x16x16xf32>
    %cst_16 = arith.constant 1.000000e+00 : f32
    %18 = vector.broadcast %cst_16 : f32 to vector<1x1x16xf32>
    "tpu.trace_start"() <{level = 10 : i32, message = "brn,bnm->brm"}> : () -> ()
    %cst_17 = arith.constant dense<0.000000e+00> : vector<1x1x16xf32>
    %19 = tpu.matmul %18, %0, %cst_17 {dimension_numbers = #tpu.dot_dimension_numbers<[2], [1], [1], [2], [0, 0, 0, 1, 1, 2], [0], [0]>} : vector<1x1x16xf32>, vector<1x16x16xf32>, vector<1x1x16xf32> -> vector<1x1x16xf32>
    "tpu.trace_stop"() : () -> ()
    "tpu.trace_start"() <{level = 10 : i32, message = "brm,bmh->brh"}> : () -> ()
    %cst_18 = arith.constant dense<0.000000e+00> : vector<1x1x16xf32>
    %20 = tpu.matmul %19, %17, %cst_18 {dimension_numbers = #tpu.dot_dimension_numbers<[2], [1], [1], [2], [0, 0, 0, 1, 1, 2], [0], [0]>} : vector<1x1x16xf32>, vector<1x16x16xf32>, vector<1x1x16xf32> -> vector<1x1x16xf32>
    "tpu.trace_stop"() : () -> ()
    %21 = vector.shape_cast %20 : vector<1x1x16xf32> to vector<1x16xf32>
    %cst_19 = arith.constant 6.250000e-02 : f32
    %22 = vector.broadcast %cst_19 : f32 to vector<1x16xf32>
    %23 = arith.mulf %21, %22 : vector<1x16xf32>
    %cst_20 = arith.constant dense<0.000000e+00> : vector<1x2xf32>
    %24 = tpu.matmul %23, %4, %cst_20 {dimension_numbers = #tpu.dot_dimension_numbers<[1], [0], [0], [1], [0, 0, 1, 1], [], []>} : vector<1x16xf32>, vector<16x2xf32>, vector<1x2xf32> -> vector<1x2xf32>
    %25 = arith.addf %24, %5 : vector<1x2xf32>
    %26 = vector.shape_cast %25 : vector<1x2xf32> to vector<1x1x2xf32>
    %c0_21 = arith.constant 0 : index
    %c0_22 = arith.constant 0 : index
    %c0_23 = arith.constant 0 : index
    %27 = vector.load %arg7[%c0_21, %c0_22, %c0_23] : memref<1x1x2xf32, #tpu.memory_space<vmem>>, vector<1x1x2xf32>
    tpu.vector_store %arg7[%c0_21, %c0_22, %c0_23], %26 {strides = array<i32>} : memref<1x1x2xf32, #tpu.memory_space<vmem>>, vector<1x1x2xf32>,
    return
  }
  func.func @transform_0(%arg0: i32) -> (i32, i32, i32) {
    %c0_i32 = arith.constant 0 : i32
    %c0_i32_0 = arith.constant 0 : i32
    %c0_i32_1 = arith.constant 0 : i32
    return %arg0, %c0_i32, %c0_i32_0 : i32, i32, i32
  }
  func.func @transform_1(%arg0: i32) -> (i32, i32, i32) {
    %c0_i32 = arith.constant 0 : i32
    %c0_i32_0 = arith.constant 0 : i32
    %c0_i32_1 = arith.constant 0 : i32
    return %arg0, %c0_i32, %c0_i32_0 : i32, i32, i32
  }
  func.func @transform_2(%arg0: i32) -> (i32, i32) {
    %c0_i32 = arith.constant 0 : i32
    %c0_i32_0 = arith.constant 0 : i32
    %c0_i32_1 = arith.constant 0 : i32
    return %c0_i32, %c0_i32_0 : i32, i32
  }
  func.func @transform_3(%arg0: i32) -> (i32, i32) {
    %c0_i32 = arith.constant 0 : i32
    %c0_i32_0 = arith.constant 0 : i32
    %c0_i32_1 = arith.constant 0 : i32
    return %c0_i32, %c0_i32_0 : i32, i32
  }
  func.func @transform_4(%arg0: i32) -> (i32, i32) {
    %c0_i32 = arith.constant 0 : i32
    %c0_i32_0 = arith.constant 0 : i32
    %c0_i32_1 = arith.constant 0 : i32
    return %c0_i32, %c0_i32_0 : i32, i32
  }
  func.func @transform_5(%arg0: i32) -> (i32, i32) {
    %c0_i32 = arith.constant 0 : i32
    %c0_i32_0 = arith.constant 0 : i32
    %c0_i32_1 = arith.constant 0 : i32
    return %c0_i32, %c0_i32_0 : i32, i32
  }
  func.func @transform_6(%arg0: i32) -> (i32, i32, i32) {
    %c0_i32 = arith.constant 0 : i32
    %c0_i32_0 = arith.constant 0 : i32
    %c0_i32_1 = arith.constant 0 : i32
    return %arg0, %c0_i32, %c0_i32_0 : i32, i32, i32
  }
}

</mosaic_0001>

<llo_original>
// kernel: tpu_custom_call.1
$region0: #{tpu_custom_call.1}
  #allocation0 [shape = 'u32[]', space=smem, size = 0x4, offset = 0x4, fixed_abs, tag = 'smem constant byte address 0x4 - core index']
  #allocation1 [shape = 'u32[144,128]{1,0:T(1,128)}', space=vmem, size = 0x12000, scoped, tag = 'internal scratch']
  %s0 = inlined_call_operand.vmem [shape: f32[2,16,16], index: 0, kind: input, shape index: {}]
  %s1 = inlined_call_operand.vmem [shape: f32[2,16,8], index: 1, kind: input, shape index: {}]
  %s2 = inlined_call_operand.vmem [shape: f32[8,16], index: 2, kind: input, shape index: {}]
  %s3 = inlined_call_operand.vmem [shape: f32[1,16], index: 3, kind: input, shape index: {}]
  %s4 = inlined_call_operand.vmem [shape: f32[16,2], index: 4, kind: input, shape index: {}]
  %s5 = inlined_call_operand.vmem [shape: f32[1,2], index: 5, kind: input, shape index: {}]
  %s6 = inlined_call_operand.hbm [shape: f32[2,1,2], index: 6, kind: output, shape index: {}]
  %s7 = sld [smem:[#allocation0]]
  $region57: #{tpu_custom_call.1} parent=0
    _
  %s9 = ssub.s32 1, %s7
  %s10 = scalar_select 0, %s9, %s7
  $region1: #{tpu_custom_call.1} parent=0
    #allocation2 [shape = 'u8[1024]{0}', space=vmem, size = 0x400, scoped, tag = 'output window, operand 0']
    #allocation3 [shape = 's32[2]{0}', space=sflag, size = 0x8, scoped, tag = 'scoped memory for tpu_custom_call.1']
    %11 = vsyncpa [#allocation3], 0
    %s12 = scalar_lea.sflag [#allocation3], 1
    %13 = vsyncpa %s12, 0
    loop: start=0, step=1, limit=4
    $region2: #{tpu_custom_call.1} parent=1 // loop_pre_header
      _
    $region3: #{tpu_custom_call.1} parent=1 // loop_header
      %s15 = sphi 0, %s19
      %p16 = scmp.ge.s32.totalorder %s15, 4
      %s25 = sphi 0, %s27
      %s28 = sphi 0, %s25
      %s29 = sphi 0, %s28
      %s45 = sphi 0, %s29
      %s51 = sphi 0, %s53
      %s54 = sphi 0, %s51
      %s55 = sphi 0, %s54
      %s71 = sphi 0, %s55
      %s75 = sphi 0, %s75
      %s77 = sphi 0, %s75
      %s78 = sphi 0, %s77
      %s92 = sphi 0, %s78
      %s96 = sphi 0, %s96
      %s98 = sphi 0, %s96
      %s99 = sphi 0, %s98
      %s113 = sphi 0, %s99
      %s117 = sphi 0, %s117
      %s119 = sphi 0, %s117
      %s120 = sphi 0, %s119
      %s134 = sphi 0, %s120
      %s138 = sphi 0, %s138
      %s140 = sphi 0, %s138
      %s141 = sphi 0, %s140
      %s155 = sphi 0, %s141
      %s161 = sphi 0, %s163
      %s164 = sphi 0, %s161
      %s165 = sphi 0, %s164
      %s181 = sphi 0, %s165
    $region4: #{tpu_custom_call.1} parent=1 // loop_header_branch
      %18 = sbr.rel (%p16) target = $region8
    $region5: #{tpu_custom_call.1} parent=1 // loop_body
      %s20 = ssub.s32 %s15, 1
      %s21 = ssub.s32 %s15, 2
      %s22 = sadd.s32 %s15, 1
      %s23 = ssub.s32 %s15, %s22
      %p24 = scmp.eq.s32.totalorder %s23, 0
      %s26 = sadd.s32 %s25, 1
      %s27 = scalar_select %p24, %s25, %s26
      %p30 = pneg %p24
      %p31 = scmp.eq.s32.totalorder %s15, 1
      %p32 = por %p30, %p31
      %p33 = scmp.ne.s32.totalorder %s25, %s28
      %p34 = scmp.eq.s32.totalorder %s15, 0
      %p35 = por %p33, %p34
      %p36 = scmp.ne.s32.totalorder %s25, %s28
      %p37 = scmp.eq.s32.totalorder %s20, 1
      %p38 = por %p36, %p37
      %p39 = scmp.ne.s32.totalorder %s28, %s29
      %p40 = scmp.eq.s32.totalorder %s20, 0
      %p41 = por %p39, %p40
      %p42 = scmp.ne.s32.totalorder %s28, %s29
      %p43 = scmp.eq.s32.totalorder %s21, 1
      %p44 = por %p42, %p43
      %p46 = scmp.ne.s32.totalorder %s29, %s45
      %p47 = scmp.eq.s32.totalorder %s21, 0
      %p48 = por %p46, %p47
      %s49 = ssub.s32 %s15, %s22
      %p50 = scmp.eq.s32.totalorder %s49, 0
      %s52 = sadd.s32 %s51, 1
      %s53 = scalar_select %p50, %s51, %s52
      %p56 = pneg %p50
      %p57 = scmp.eq.s32.totalorder %s15, 1
      %p58 = por %p56, %p57
      %p59 = scmp.ne.s32.totalorder %s51, %s54
      %p60 = scmp.eq.s32.totalorder %s15, 0
      %p61 = por %p59, %p60
      %p62 = scmp.ne.s32.totalorder %s51, %s54
      %p63 = scmp.eq.s32.totalorder %s20, 1
      %p64 = por %p62, %p63
      %p65 = scmp.ne.s32.totalorder %s54, %s55
      %p66 = scmp.eq.s32.totalorder %s20, 0
      %p67 = por %p65, %p66
      %p68 = scmp.ne.s32.totalorder %s54, %s55
      %p69 = scmp.eq.s32.totalorder %s21, 1
      %p70 = por %p68, %p69
      %p72 = scmp.ne.s32.totalorder %s55, %s71
      %p73 = scmp.eq.s32.totalorder %s21, 0
      %p74 = por %p72, %p73
      %s76 = sadd.s32 %s75, 1
      %p79 = scmp.eq.s32.totalorder %s15, 1
      %p80 = scmp.ne.s32.totalorder %s75, %s77
      %p81 = scmp.eq.s32.totalorder %s15, 0
      %p82 = por %p80, %p81
      %p83 = scmp.ne.s32.totalorder %s75, %s77
      %p84 = scmp.eq.s32.totalorder %s20, 1
      %p85 = por %p83, %p84
      %p86 = scmp.ne.s32.totalorder %s77, %s78
      %p87 = scmp.eq.s32.totalorder %s20, 0
      %p88 = por %p86, %p87
      %p89 = scmp.ne.s32.totalorder %s77, %s78
      %p90 = scmp.eq.s32.totalorder %s21, 1
      %p91 = por %p89, %p90
      %p93 = scmp.ne.s32.totalorder %s78, %s92
      %p94 = scmp.eq.s32.totalorder %s21, 0
      %p95 = por %p93, %p94
      %s97 = sadd.s32 %s96, 1
      %p100 = scmp.eq.s32.totalorder %s15, 1
      %p101 = scmp.ne.s32.totalorder %s96, %s98
      %p102 = scmp.eq.s32.totalorder %s15, 0
      %p103 = por %p101, %p102
      %p104 = scmp.ne.s32.totalorder %s96, %s98
      %p105 = scmp.eq.s32.totalorder %s20, 1
      %p106 = por %p104, %p105
      %p107 = scmp.ne.s32.totalorder %s98, %s99
      %p108 = scmp.eq.s32.totalorder %s20, 0
      %p109 = por %p107, %p108
      %p110 = scmp.ne.s32.totalorder %s98, %s99
      %p111 = scmp.eq.s32.totalorder %s21, 1
      %p112 = por %p110, %p111
      %p114 = scmp.ne.s32.totalorder %s99, %s113
      %p115 = scmp.eq.s32.totalorder %s21, 0
      %p116 = por %p114, %p115
      %s118 = sadd.s32 %s117, 1
      %p121 = scmp.eq.s32.totalorder %s15, 1
      %p122 = scmp.ne.s32.totalorder %s117, %s119
      %p123 = scmp.eq.s32.totalorder %s15, 0
      %p124 = por %p122, %p123
      %p125 = scmp.ne.s32.totalorder %s117, %s119
      %p126 = scmp.eq.s32.totalorder %s20, 1
      %p127 = por %p125, %p126
      %p128 = scmp.ne.s32.totalorder %s119, %s120
      %p129 = scmp.eq.s32.totalorder %s20, 0
      %p130 = por %p128, %p129
      %p131 = scmp.ne.s32.totalorder %s119, %s120
      %p132 = scmp.eq.s32.totalorder %s21, 1
      %p133 = por %p131, %p132
      %p135 = scmp.ne.s32.totalorder %s120, %s134
      %p136 = scmp.eq.s32.totalorder %s21, 0
      %p137 = por %p135, %p136
      %s139 = sadd.s32 %s138, 1
      %p142 = scmp.eq.s32.totalorder %s15, 1
      %p143 = scmp.ne.s32.totalorder %s138, %s140
      %p144 = scmp.eq.s32.totalorder %s15, 0
      %p145 = por %p143, %p144
      %p146 = scmp.ne.s32.totalorder %s138, %s140
      %p147 = scmp.eq.s32.totalorder %s20, 1
      %p148 = por %p146, %p147
      %p149 = scmp.ne.s32.totalorder %s140, %s141
      %p150 = scmp.eq.s32.totalorder %s20, 0
      %p151 = por %p149, %p150
      %p152 = scmp.ne.s32.totalorder %s140, %s141
      %p153 = scmp.eq.s32.totalorder %s21, 1
      %p154 = por %p152, %p153
      %p156 = scmp.ne.s32.totalorder %s141, %s155
      %p157 = scmp.eq.s32.totalorder %s21, 0
      %p158 = por %p156, %p157
      %s159 = ssub.s32 %s15, %s22
      %p160 = scmp.eq.s32.totalorder %s159, 0
      %s162 = sadd.s32 %s161, 1
      %s163 = scalar_select %p160, %s161, %s162
      %p166 = pneg %p160
      %p167 = scmp.eq.s32.totalorder %s15, 1
      %p168 = por %p166, %p167
      %p169 = scmp.ne.s32.totalorder %s161, %s164
      %p170 = scmp.eq.s32.totalorder %s15, 0
      %p171 = por %p169, %p170
      %p172 = scmp.ne.s32.totalorder %s161, %s164
      %p173 = scmp.eq.s32.totalorder %s20, 1
      %p174 = por %p172, %p173
      %p175 = scmp.ne.s32.totalorder %s164, %s165
      %p176 = scmp.eq.s32.totalorder %s20, 0
      %p177 = por %p175, %p176
      %p178 = scmp.ne.s32.totalorder %s164, %s165
      %p179 = scmp.eq.s32.totalorder %s21, 1
      %p180 = por %p178, %p179
      %p182 = scmp.ne.s32.totalorder %s165, %s181
      %p183 = scmp.eq.s32.totalorder %s21, 0
      %p184 = por %p182, %p183
      %p185 = scmp.le.s32.totalorder 1, %s15
      %p186 = scmp.lt.s32.totalorder %s15, 3
      %p187 = pnand %p185, %p186
      %p188 = pneg %p187
      // Predicated region
      $region9: #{tpu_custom_call.1} parent=5 // pred_check
        _
      $region10: #{tpu_custom_call.1} parent=5 // pred_check_branch
        %190 = sbr.rel (%p187) target = $region12
      $region11: #{tpu_custom_call.1} parent=5 // pred_region
        %s191 = ssub.s32 %s15, 1
        // Predicated region
        $region13: #{tpu_custom_call.1} parent=11 // pred_check
          %p192 = pneg %p88
        $region14: #{tpu_custom_call.1} parent=11 // pred_check_branch
          %194 = sbr.rel (%p192) target = $region16
        $region15: #{tpu_custom_call.1} parent=11 // pred_region
          _
        $region16: #{tpu_custom_call.1} parent=11 // pred_fallthru
          _
        // Predicated region
        $region17: #{tpu_custom_call.1} parent=11 // pred_check
          %p195 = pneg %p109
        $region18: #{tpu_custom_call.1} parent=11 // pred_check_branch
          %197 = sbr.rel (%p195) target = $region20
        $region19: #{tpu_custom_call.1} parent=11 // pred_region
          _
        $region20: #{tpu_custom_call.1} parent=11 // pred_fallthru
          _
        // Predicated region
        $region21: #{tpu_custom_call.1} parent=11 // pred_check
          %p198 = pneg %p130
        $region22: #{tpu_custom_call.1} parent=11 // pred_check_branch
          %200 = sbr.rel (%p198) target = $region24
        $region23: #{tpu_custom_call.1} parent=11 // pred_region
          _
        $region24: #{tpu_custom_call.1} parent=11 // pred_fallthru
          _
        // Predicated region
        $region25: #{tpu_custom_call.1} parent=11 // pred_check
          %p201 = pneg %p151
        $region26: #{tpu_custom_call.1} parent=11 // pred_check_branch
          %203 = sbr.rel (%p201) target = $region28
        $region27: #{tpu_custom_call.1} parent=11 // pred_region
          _
        $region28: #{tpu_custom_call.1} parent=11 // pred_fallthru
          _
      $region12: #{tpu_custom_call.1} parent=5 // pred_fallthru
        _
      %p204 = scmp.lt.s32.totalorder %s15, 2
      // Predicated region
      $region29: #{tpu_custom_call.1} parent=5 // pred_check
        %p205 = pneg %p204
      $region30: #{tpu_custom_call.1} parent=5 // pred_check_branch
        %207 = sbr.rel (%p205) target = $region32
      $region31: #{tpu_custom_call.1} parent=5 // pred_region
        // Predicated region
        $region33: #{tpu_custom_call.1} parent=31 // pred_check
          %p208 = pneg %p35
        $region34: #{tpu_custom_call.1} parent=31 // pred_check_branch
          %210 = sbr.rel (%p208) target = $region36
        $region35: #{tpu_custom_call.1} parent=31 // pred_region
          %p211 = scmp.lt.s32.totalorder %s15, 1
          %s212 = scalar_select %p211, %s15, 1
          %s213 = smul.addr %s212, 2
          %s214 = smul.addr %s213, 8
          %s215 = scalar_lea.vmem %s0, %s214
        $region36: #{tpu_custom_call.1} parent=31 // pred_fallthru
          _
        // Predicated region
        $region37: #{tpu_custom_call.1} parent=31 // pred_check
          %p216 = pneg %p61
        $region38: #{tpu_custom_call.1} parent=31 // pred_check_branch
          %218 = sbr.rel (%p216) target = $region40
        $region39: #{tpu_custom_call.1} parent=31 // pred_region
          %p219 = scmp.lt.s32.totalorder %s15, 1
          %s220 = scalar_select %p219, %s15, 1
          %s221 = smul.addr %s220, 2
          %s222 = smul.addr %s221, 8
          %s223 = scalar_lea.vmem %s1, %s222
        $region40: #{tpu_custom_call.1} parent=31 // pred_fallthru
          _
      $region32: #{tpu_custom_call.1} parent=5 // pred_fallthru
        _
      %p224 = scmp.le.s32.totalorder 1, %s15
      %p225 = scmp.lt.s32.totalorder %s15, 3
      %p226 = pnand %p224, %p225
      %p227 = pneg %p226
      // Predicated region
      $region41: #{tpu_custom_call.1} parent=5 // pred_check
        _
      $region42: #{tpu_custom_call.1} parent=5 // pred_check_branch
        %229 = sbr.rel (%p226) target = $region44
      $region43: #{tpu_custom_call.1} parent=5 // pred_region
        %s230 = ssub.s32 %s15, 1
        %p231 = scmp.lt.s32.totalorder %s20, 1
        %s232 = scalar_select %p231, %s20, 1
        %s233 = smul.addr %s232, 2
        %s234 = smul.addr %s233, 8
        %s235 = scalar_lea.vmem %s0, %s234
        %p236 = pneg %p41
        %p237 = pneg %p38
        %p238 = scmp.lt.s32.totalorder %s20, 1
        %s239 = scalar_select %p238, %s20, 1
        %s240 = smul.addr %s239, 2
        %s241 = smul.addr %s240, 8
        %s242 = scalar_lea.vmem %s1, %s241
        %p243 = pneg %p67
        %p244 = pneg %p64
        %p245 = pneg %p88
        %p246 = pneg %p85
        %p247 = pneg %p109
        %p248 = pneg %p106
        %p249 = pneg %p130
        %p250 = pneg %p127
        %p251 = pneg %p151
        %p252 = pneg %p148
        %p253 = pneg %p177
        %p254 = pneg %p174
        %s255 = sand.u32 %s164, 1
        %s256 = scalar_lea.sflag [#allocation3], %s255
        %s257 = sand.u32 %s164, 1
        %s258 = scalar_lea.vmem [#allocation2], %s257
        %p259 = scmp.lt.s32.totalorder %s20, 1
        %s260 = scalar_select %p259, %s20, 1
        %s261 = smul.addr %s260, 2
        %s262 = smul.addr %s261, 8
        %s263 = scalar_lea.vmem %s0, %s262
        %p264 = scmp.lt.s32.totalorder %s20, 1
        %s265 = scalar_select %p264, %s20, 1
        %s266 = smul.addr %s265, 2
        %s267 = smul.addr %s266, 8
        %s268 = scalar_lea.vmem %s1, %s267
        %v269 = vld [vmem:[%s263] sm:$0xff]
        %v270 = vld [vmem:[%s263 + $0x8] sm:$0xff]
        %v271 = vld [vmem:[%s268] sm:$0xff]
        %v272 = vld [vmem:[%s268 + $0x8] sm:$0xff]
        %v273 = vld [vmem:[%s2] sm:$0xff]
        %v274 = vld [vmem:[%s3] sm:$0x1]
        %v275 = vld [vmem:[%s4] sm:$0xff]
        %v276 = vld [vmem:[%s4 + $0x8] sm:$0xff]
        %v277 = vld [vmem:[%s5] sm:$0x1]
        %vm278 = vcmask 64512
        %v280 = vsel %vm278, %v271, 0
        %v283 = vsel %vm278, %v272, 0
        %285 = vmatprep.subr.mxu0 0.0
        %286 = vmatpush1.msra.mxu0 %v273
        %287 = vmatprep.subr.mxu0 0.0
        %288 = vmatpush1.msra.mxu0 0.0
        %289 = vmatprep.subr.mxu0 0.0
        %290 = vmatpush1.msra.mxu0 0.0
        %291 = vmatprep.subr.mxu0 0.0
        %292 = vmatpush1.msra.mxu0 0.0
        %293 = vmatprep.subr.mxu0 0.0
        %294 = vmatpush1.msra.mxu0 0.0
        %295 = vmatprep.subr.mxu0 0.0
        %296 = vmatpush1.msra.mxu0 0.0
        %297 = vmatprep.subr.mxu0 0.0
        %298 = vmatpush1.msra.mxu0 0.0
        %299 = vmatprep.subr.mxu0 0.0
        %300 = vmatpush1.msra.mxu0 0.0
        %301 = vmatprep.subr.mxu0 0.0
        %302 = vmatpush1.msra.mxu0 0.0
        %303 = vmatprep.subr.mxu0 0.0
        %304 = vmatpush1.msra.mxu0 0.0
        %305 = vmatprep.subr.mxu0 0.0
        %306 = vmatpush1.msra.mxu0 0.0
        %307 = vmatprep.subr.mxu0 0.0
        %308 = vmatpush1.msra.mxu0 0.0
        %309 = vmatprep.subr.mxu0 0.0
        %310 = vmatpush1.msra.mxu0 0.0
        %311 = vmatprep.subr.mxu0 0.0
        %312 = vmatpush1.msra.mxu0 0.0
        %313 = vmatprep.subr.mxu0 0.0
        %314 = vmatpush1.msra.mxu0 0.0
        %315 = vmatprep.subr.mxu0 0.0
        %316 = vmatpush1.msra.mxu0 0.0
        %317 = vmatprep.subr.mxu0 0.0
        %318 = vmatpush1.msra.mxu0 0.0
        %319 = vmatprep.subr.mxu0 0.0
        %320 = vmatpush1.msra.mxu0 0.0
        %321 = vmatprep.subr.mxu0 0.0
        %322 = vmatpush1.msra.mxu0 0.0
        %323 = vmatprep.subr.mxu0 0.0
        %324 = vmatpush1.msra.mxu0 0.0
        %325 = vmatprep.subr.mxu0 0.0
        %326 = vmatpush1.msra.mxu0 0.0
        %327 = vmatprep.subr.mxu0 0.0
        %328 = vmatpush1.msra.mxu0 0.0
        %329 = vmatprep.subr.mxu0 0.0
        %330 = vmatpush1.msra.mxu0 0.0
        %331 = vmatprep.subr.mxu0 0.0
        %332 = vmatpush1.msra.mxu0 0.0
        %333 = vmatprep.subr.mxu0 0.0
        %334 = vmatpush1.msra.mxu0 0.0
        %335 = vmatprep.subr.mxu0 0.0
        %336 = vmatpush1.msra.mxu0 0.0
        %337 = vmatprep.subr.mxu0 0.0
        %338 = vmatpush1.msra.mxu0 0.0
        %339 = vmatprep.subr.mxu0 0.0
        %340 = vmatpush1.msra.mxu0 0.0
        %341 = vmatprep.subr.mxu0 0.0
        %342 = vmatpush1.msra.mxu0 0.0
        %343 = vmatprep.subr.mxu0 0.0
        %344 = vmatpush1.msra.mxu0 0.0
        %345 = vmatprep.subr.mxu0 0.0
        %346 = vmatpush1.msra.mxu0 0.0
        %347 = vmatprep.subr.mxu0 0.0
        %348 = vmatpush1.msra.mxu0 0.0
        %349 = vmatprep.mubr.f32.mxu0 0.0
        %350 = vmatmul.mubr.f32.gmra.mrb[0].mxu0 %v280
        %v351 = vpop.f32.mrb[0].mxu0
        %v352 = vadd.f32 0.0, %v351
        %v353 = vpop.f32.mrb[0].mxu0
        %354 = vmatprep.mubr.f32.mxu0 0.0
        %355 = vmatmul.mubr.f32.gmra.mrb[0].mxu0 %v283
        %v356 = vpop.f32.mrb[0].mxu0
        %v357 = vadd.f32 0.0, %v356
        %v358 = vpop.f32.mrb[0].mxu0
        %359 = vdwg.mxu0
        %v361 = vlaneseq
        %v362 = vshrl.u32 %v361, 7
        %v363 = vsub.s32 0, %v362
        %v364 = vrot.slane %v274, %v363
        %vm366 = vcmask 130048
        %v368 = vsel %vm366, %v269, 0
        %v371 = vsel %vm366, %v270, 0
        %373 = vmatprep.subr.mxu0 0.0
        %374 = vmatpush1.msra.mxu0 %v352
        %375 = vmatprep.subr.mxu0 0.0
        %376 = vmatpush1.msra.mxu0 %v357
        %377 = vmatprep.subr.mxu0 0.0
        %378 = vmatpush1.msra.mxu0 0.0
        %379 = vmatprep.subr.mxu0 0.0
        %380 = vmatpush1.msra.mxu0 0.0
        %381 = vmatprep.subr.mxu0 0.0
        %382 = vmatpush1.msra.mxu0 0.0
        %383 = vmatprep.subr.mxu0 0.0
        %384 = vmatpush1.msra.mxu0 0.0
        %385 = vmatprep.subr.mxu0 0.0
        %386 = vmatpush1.msra.mxu0 0.0
        %387 = vmatprep.subr.mxu0 0.0
        %388 = vmatpush1.msra.mxu0 0.0
        %389 = vmatprep.subr.mxu0 0.0
        %390 = vmatpush1.msra.mxu0 0.0
        %391 = vmatprep.subr.mxu0 0.0
        %392 = vmatpush1.msra.mxu0 0.0
        %393 = vmatprep.subr.mxu0 0.0
        %394 = vmatpush1.msra.mxu0 0.0
        %395 = vmatprep.subr.mxu0 0.0
        %396 = vmatpush1.msra.mxu0 0.0
        %397 = vmatprep.subr.mxu0 0.0
        %398 = vmatpush1.msra.mxu0 0.0
        %399 = vmatprep.subr.mxu0 0.0
        %400 = vmatpush1.msra.mxu0 0.0
        %401 = vmatprep.subr.mxu0 0.0
        %402 = vmatpush1.msra.mxu0 0.0
        %403 = vmatprep.subr.mxu0 0.0
        %404 = vmatpush1.msra.mxu0 0.0
        %405 = vmatprep.subr.mxu0 0.0
        %406 = vmatpush1.msra.mxu0 0.0
        %407 = vmatprep.subr.mxu0 0.0
        %408 = vmatpush1.msra.mxu0 0.0
        %409 = vmatprep.subr.mxu0 0.0
        %410 = vmatpush1.msra.mxu0 0.0
        %411 = vmatprep.subr.mxu0 0.0
        %412 = vmatpush1.msra.mxu0 0.0
        %413 = vmatprep.subr.mxu0 0.0
        %414 = vmatpush1.msra.mxu0 0.0
        %415 = vmatprep.subr.mxu0 0.0
        %416 = vmatpush1.msra.mxu0 0.0
        %417 = vmatprep.subr.mxu0 0.0
        %418 = vmatpush1.msra.mxu0 0.0
        %419 = vmatprep.subr.mxu0 0.0
        %420 = vmatpush1.msra.mxu0 0.0
        %421 = vmatprep.subr.mxu0 0.0
        %422 = vmatpush1.msra.mxu0 0.0
        %423 = vmatprep.subr.mxu0 0.0
        %424 = vmatpush1.msra.mxu0 0.0
        %425 = vmatprep.subr.mxu0 0.0
        %426 = vmatpush1.msra.mxu0 0.0
        %427 = vmatprep.subr.mxu0 0.0
        %428 = vmatpush1.msra.mxu0 0.0
        %429 = vmatprep.subr.mxu0 0.0
        %430 = vmatpush1.msra.mxu0 0.0
        %431 = vmatprep.subr.mxu0 0.0
        %432 = vmatpush1.msra.mxu0 0.0
        %433 = vmatprep.subr.mxu0 0.0
        %434 = vmatpush1.msra.mxu0 0.0
        %435 = vmatprep.subr.mxu0 0.0
        %436 = vmatpush1.msra.mxu0 0.0
        %437 = vmatprep.mubr.f32.mxu0 0.0
        %438 = vmatmul.mubr.f32.gmra.mrb[0].mxu0 %v368
        %v439 = vpop.f32.mrb[0].mxu0
        %v440 = vadd.f32 %v364, %v439
        %v441 = vpop.f32.mrb[0].mxu0
        %442 = vmatprep.mubr.f32.mxu0 0.0
        %443 = vmatmul.mubr.f32.gmra.mrb[0].mxu0 %v371
        %v444 = vpop.f32.mrb[0].mxu0
        %v445 = vadd.f32 %v364, %v444
        %v446 = vpop.f32.mrb[0].mxu0
        %447 = vdwg.mxu0
        %vm448 = vcmp.gt.f32.partialorder %v440, 0.0
        %vm449 = vcmp.gt.f32.partialorder %v445, 0.0
        %v450 = vmul.f32 %v440, 0.01
        %v451 = vmul.f32 %v445, 0.01
        %v452 = vsel %vm448, %v440, %v450
        %v453 = vsel %vm449, %v445, %v451
        %v455 = vsel %vm366, 1.0, 0
        %457 = vmatprep.subr.mxu0 0.0
        %458 = vmatpush1.msra.mxu0 %v269
        %459 = vmatprep.subr.mxu0 0.0
        %460 = vmatpush1.msra.mxu0 %v270
        %461 = vmatprep.subr.mxu0 0.0
        %462 = vmatpush1.msra.mxu0 0.0
        %463 = vmatprep.subr.mxu0 0.0
        %464 = vmatpush1.msra.mxu0 0.0
        %465 = vmatprep.subr.mxu0 0.0
        %466 = vmatpush1.msra.mxu0 0.0
        %467 = vmatprep.subr.mxu0 0.0
        %468 = vmatpush1.msra.mxu0 0.0
        %469 = vmatprep.subr.mxu0 0.0
        %470 = vmatpush1.msra.mxu0 0.0
        %471 = vmatprep.subr.mxu0 0.0
        %472 = vmatpush1.msra.mxu0 0.0
        %473 = vmatprep.subr.mxu0 0.0
        %474 = vmatpush1.msra.mxu0 0.0
        %475 = vmatprep.subr.mxu0 0.0
        %476 = vmatpush1.msra.mxu0 0.0
        %477 = vmatprep.subr.mxu0 0.0
        %478 = vmatpush1.msra.mxu0 0.0
        %479 = vmatprep.subr.mxu0 0.0
        %480 = vmatpush1.msra.mxu0 0.0
        %481 = vmatprep.subr.mxu0 0.0
        %482 = vmatpush1.msra.mxu0 0.0
        %483 = vmatprep.subr.mxu0 0.0
        %484 = vmatpush1.msra.mxu0 0.0
        %485 = vmatprep.subr.mxu0 0.0
        %486 = vmatpush1.msra.mxu0 0.0
        %487 = vmatprep.subr.mxu0 0.0
        %488 = vmatpush1.msra.mxu0 0.0
        %489 = vmatprep.subr.mxu0 0.0
        %490 = vmatpush1.msra.mxu0 0.0
        %491 = vmatprep.subr.mxu0 0.0
        %492 = vmatpush1.msra.mxu0 0.0
        %493 = vmatprep.subr.mxu0 0.0
        %494 = vmatpush1.msra.mxu0 0.0
        %495 = vmatprep.subr.mxu0 0.0
        %496 = vmatpush1.msra.mxu0 0.0
        %497 = vmatprep.subr.mxu0 0.0
        %498 = vmatpush1.msra.mxu0 0.0
        %499 = vmatprep.subr.mxu0 0.0
        %500 = vmatpush1.msra.mxu0 0.0
        %501 = vmatprep.subr.mxu0 0.0
        %502 = vmatpush1.msra.mxu0 0.0
        %503 = vmatprep.subr.mxu0 0.0
        %504 = vmatpush1.msra.mxu0 0.0
        %505 = vmatprep.subr.mxu0 0.0
        %506 = vmatpush1.msra.mxu0 0.0
        %507 = vmatprep.subr.mxu0 0.0
        %508 = vmatpush1.msra.mxu0 0.0
        %509 = vmatprep.subr.mxu0 0.0
        %510 = vmatpush1.msra.mxu0 0.0
        %511 = vmatprep.subr.mxu0 0.0
        %512 = vmatpush1.msra.mxu0 0.0
        %513 = vmatprep.subr.mxu0 0.0
        %514 = vmatpush1.msra.mxu0 0.0
        %515 = vmatprep.subr.mxu0 0.0
        %516 = vmatpush1.msra.mxu0 0.0
        %517 = vmatprep.subr.mxu0 0.0
        %518 = vmatpush1.msra.mxu0 0.0
        %519 = vmatprep.subr.mxu0 0.0
        %520 = vmatpush1.msra.mxu0 0.0
        %521 = vmatprep.mubr.f32.mxu0 0.0
        %522 = vmatmul.mubr.f32.gmra.mrb[0].mxu0 %v455
        %v523 = vpop.f32.mrb[0].mxu0
        %v524 = vadd.f32 0.0, %v523
        %v525 = vpop.f32.mrb[0].mxu0
        %526 = vdwg.mxu0
        %v528 = vsel %vm366, %v524, 0
        %530 = vmatprep.subr.mxu0 0.0
        %531 = vmatpush1.msra.mxu0 %v452
        %532 = vmatprep.subr.mxu0 0.0
        %533 = vmatpush1.msra.mxu0 %v453
        %534 = vmatprep.subr.mxu0 0.0
        %535 = vmatpush1.msra.mxu0 0.0
        %536 = vmatprep.subr.mxu0 0.0
        %537 = vmatpush1.msra.mxu0 0.0
        %538 = vmatprep.subr.mxu0 0.0
        %539 = vmatpush1.msra.mxu0 0.0
        %540 = vmatprep.subr.mxu0 0.0
        %541 = vmatpush1.msra.mxu0 0.0
        %542 = vmatprep.subr.mxu0 0.0
        %543 = vmatpush1.msra.mxu0 0.0
        %544 = vmatprep.subr.mxu0 0.0
        %545 = vmatpush1.msra.mxu0 0.0
        %546 = vmatprep.subr.mxu0 0.0
        %547 = vmatpush1.msra.mxu0 0.0
        %548 = vmatprep.subr.mxu0 0.0
        %549 = vmatpush1.msra.mxu0 0.0
        %550 = vmatprep.subr.mxu0 0.0
        %551 = vmatpush1.msra.mxu0 0.0
        %552 = vmatprep.subr.mxu0 0.0
        %553 = vmatpush1.msra.mxu0 0.0
        %554 = vmatprep.subr.mxu0 0.0
        %555 = vmatpush1.msra.mxu0 0.0
        %556 = vmatprep.subr.mxu0 0.0
        %557 = vmatpush1.msra.mxu0 0.0
        %558 = vmatprep.subr.mxu0 0.0
        %559 = vmatpush1.msra.mxu0 0.0
        %560 = vmatprep.subr.mxu0 0.0
        %561 = vmatpush1.msra.mxu0 0.0
        %562 = vmatprep.subr.mxu0 0.0
        %563 = vmatpush1.msra.mxu0 0.0
        %564 = vmatprep.subr.mxu0 0.0
        %565 = vmatpush1.msra.mxu0 0.0
        %566 = vmatprep.subr.mxu0 0.0
        %567 = vmatpush1.msra.mxu0 0.0
        %568 = vmatprep.subr.mxu0 0.0
        %569 = vmatpush1.msra.mxu0 0.0
        %570 = vmatprep.subr.mxu0 0.0
        %571 = vmatpush1.msra.mxu0 0.0
        %572 = vmatprep.subr.mxu0 0.0
        %573 = vmatpush1.msra.mxu0 0.0
        %574 = vmatprep.subr.mxu0 0.0
        %575 = vmatpush1.msra.mxu0 0.0
        %576 = vmatprep.subr.mxu0 0.0
        %577 = vmatpush1.msra.mxu0 0.0
        %578 = vmatprep.subr.mxu0 0.0
        %579 = vmatpush1.msra.mxu0 0.0
        %580 = vmatprep.subr.mxu0 0.0
        %581 = vmatpush1.msra.mxu0 0.0
        %582 = vmatprep.subr.mxu0 0.0
        %583 = vmatpush1.msra.mxu0 0.0
        %584 = vmatprep.subr.mxu0 0.0
        %585 = vmatpush1.msra.mxu0 0.0
        %586 = vmatprep.subr.mxu0 0.0
        %587 = vmatpush1.msra.mxu0 0.0
        %588 = vmatprep.subr.mxu0 0.0
        %589 = vmatpush1.msra.mxu0 0.0
        %590 = vmatprep.subr.mxu0 0.0
        %591 = vmatpush1.msra.mxu0 0.0
        %592 = vmatprep.subr.mxu0 0.0
        %593 = vmatpush1.msra.mxu0 0.0
        %594 = vmatprep.mubr.f32.mxu0 0.0
        %595 = vmatmul.mubr.f32.gmra.mrb[0].mxu0 %v528
        %v596 = vpop.f32.mrb[0].mxu0
        %v597 = vadd.f32 0.0, %v596
        %v598 = vpop.f32.mrb[0].mxu0
        %599 = vdwg.mxu0
        %v600 = vmul.f32 %v597, 0.0625
        %v602 = vsel %vm366, %v600, 0
        %604 = vmatprep.subr.mxu0 0.0
        %605 = vmatpush1.msra.mxu0 %v275
        %606 = vmatprep.subr.mxu0 0.0
        %607 = vmatpush1.msra.mxu0 %v276
        %608 = vmatprep.subr.mxu0 0.0
        %609 = vmatpush1.msra.mxu0 0.0
        %610 = vmatprep.subr.mxu0 0.0
        %611 = vmatpush1.msra.mxu0 0.0
        %612 = vmatprep.subr.mxu0 0.0
        %613 = vmatpush1.msra.mxu0 0.0
        %614 = vmatprep.subr.mxu0 0.0
        %615 = vmatpush1.msra.mxu0 0.0
        %616 = vmatprep.subr.mxu0 0.0
        %617 = vmatpush1.msra.mxu0 0.0
        %618 = vmatprep.subr.mxu0 0.0
        %619 = vmatpush1.msra.mxu0 0.0
        %620 = vmatprep.subr.mxu0 0.0
        %621 = vmatpush1.msra.mxu0 0.0
        %622 = vmatprep.subr.mxu0 0.0
        %623 = vmatpush1.msra.mxu0 0.0
        %624 = vmatprep.subr.mxu0 0.0
        %625 = vmatpush1.msra.mxu0 0.0
        %626 = vmatprep.subr.mxu0 0.0
        %627 = vmatpush1.msra.mxu0 0.0
        %628 = vmatprep.subr.mxu0 0.0
        %629 = vmatpush1.msra.mxu0 0.0
        %630 = vmatprep.subr.mxu0 0.0
        %631 = vmatpush1.msra.mxu0 0.0
        %632 = vmatprep.subr.mxu0 0.0
        %633 = vmatpush1.msra.mxu0 0.0
        %634 = vmatprep.subr.mxu0 0.0
        %635 = vmatpush1.msra.mxu0 0.0
        %636 = vmatprep.subr.mxu0 0.0
        %637 = vmatpush1.msra.mxu0 0.0
        %638 = vmatprep.subr.mxu0 0.0
        %639 = vmatpush1.msra.mxu0 0.0
        %640 = vmatprep.subr.mxu0 0.0
        %641 = vmatpush1.msra.mxu0 0.0
        %642 = vmatprep.subr.mxu0 0.0
        %643 = vmatpush1.msra.mxu0 0.0
        %644 = vmatprep.subr.mxu0 0.0
        %645 = vmatpush1.msra.mxu0 0.0
        %646 = vmatprep.subr.mxu0 0.0
        %647 = vmatpush1.msra.mxu0 0.0
        %648 = vmatprep.subr.mxu0 0.0
        %649 = vmatpush1.msra.mxu0 0.0
        %650 = vmatprep.subr.mxu0 0.0
        %651 = vmatpush1.msra.mxu0 0.0
        %652 = vmatprep.subr.mxu0 0.0
        %653 = vmatpush1.msra.mxu0 0.0
        %654 = vmatprep.subr.mxu0 0.0
        %655 = vmatpush1.msra.mxu0 0.0
        %656 = vmatprep.subr.mxu0 0.0
        %657 = vmatpush1.msra.mxu0 0.0
        %658 = vmatprep.subr.mxu0 0.0
        %659 = vmatpush1.msra.mxu0 0.0
        %660 = vmatprep.subr.mxu0 0.0
        %661 = vmatpush1.msra.mxu0 0.0
        %662 = vmatprep.subr.mxu0 0.0
        %663 = vmatpush1.msra.mxu0 0.0
        %664 = vmatprep.subr.mxu0 0.0
        %665 = vmatpush1.msra.mxu0 0.0
        %666 = vmatprep.subr.mxu0 0.0
        %667 = vmatpush1.msra.mxu0 0.0
        %668 = vmatprep.mubr.f32.mxu0 0.0
        %669 = vmatmul.mubr.f32.gmra.mrb[0].mxu0 %v602
        %v670 = vpop.f32.mrb[0].mxu0
        %v671 = vadd.f32 %v277, %v670
        %v672 = vpop.f32.mrb[0].mxu0
        %673 = vdwg.mxu0
        %vm674 = vcmask 8192
        %675 = vst.msk [vmem:[%s258] sm:$0x1] %vm674, %v671
        %s676 = sand.u32 %s164, 1
        %s677 = scalar_lea.sflag [#allocation3], %s676
        %s678 = sand.u32 %s164, 1
        %s679 = scalar_lea.vmem [#allocation2], %s678
        // Predicated region
        $region45: #{tpu_custom_call.1} parent=43 // pred_check
          %p680 = pneg %p174
        $region46: #{tpu_custom_call.1} parent=43 // pred_check_branch
          %682 = sbr.rel (%p680) target = $region48
        $region47: #{tpu_custom_call.1} parent=43 // pred_region
          %s684 = ssub.s32 16, 16
          %685 = vsyncadd %s677, %s684
          %s686 = smul.addr %s20, 16
          %s687 = scalar_lea.hbm %s6, %s686
          %s689 = sshll.u32 %s679, 4
          %s690 = int_to_ptr.vmem [resolvable:$true] %s689
          %692 = dma.vmem_to_hbm [thread:$0]  %s690, 16, %s687, %s677
        $region48: #{tpu_custom_call.1} parent=43 // pred_fallthru
          _
      $region44: #{tpu_custom_call.1} parent=5 // pred_fallthru
        _
      %p693 = scmp.le.s32.totalorder 2, %s15
      // Predicated region
      $region49: #{tpu_custom_call.1} parent=5 // pred_check
        %p694 = pneg %p693
      $region50: #{tpu_custom_call.1} parent=5 // pred_check_branch
        %696 = sbr.rel (%p694) target = $region52
      $region51: #{tpu_custom_call.1} parent=5 // pred_region
        %s697 = ssub.s32 %s15, 2
        // Predicated region
        $region53: #{tpu_custom_call.1} parent=51 // pred_check
          %p698 = pneg %p180
        $region54: #{tpu_custom_call.1} parent=51 // pred_check_branch
          %700 = sbr.rel (%p698) target = $region56
        $region55: #{tpu_custom_call.1} parent=51 // pred_region
          %s701 = sand.u32 %s165, 1
          %s702 = scalar_lea.sflag [#allocation3], %s701
          %s703 = sand.u32 %s165, 1
          %s704 = scalar_lea.vmem [#allocation2], %s703
          %705 = dma.done %s702, 16
        $region56: #{tpu_custom_call.1} parent=51 // pred_fallthru
          _
      $region52: #{tpu_custom_call.1} parent=5 // pred_fallthru
        _
    $region6: #{tpu_custom_call.1} parent=1 // loop_footer
      %s19 = sadd.s32 1, %s15
    $region7: #{tpu_custom_call.1} parent=1 // loop_footer_branch
      %14 = sbr.rel target = $region3
    $region8: #{tpu_custom_call.1} parent=1 // loop_exit
      _
    %706 = vsyncpa [#allocation3], 1
    %s707 = scalar_lea.sflag [#allocation3], 1
    %708 = vsyncpa %s707, 1

</llo_original>
